<compile_context>
chip_gen: v5e
topology: v5e:2x2
jax: 0.10.0
libtpu: 0.0.40
codegen_flags: <defaults>
</compile_context>

<pallas_src>
import jax
import jax.numpy as jnp
from jax import lax
from jax.experimental import pallas as pl
from jax.experimental.pallas import tpu as pltpu

_LANES = 128


def _divisors(n):
    out = set()
    d = 1
    while d * d <= n:
        if n % d == 0:
            out.add(d)
            out.add(n // d)
        d += 1
    return sorted(out)


def _choose_m(nc, hf, wf, itemsize, budget, block_cap):
    """Images per grid step: a divisor of nc, sized to the VMEM budget."""

    def step_vmem(m):
        elems = m * hf * wf
        # 2x double-buffered input + ~6 block-sized f32 temporaries
        # + 2 block-sized f32 accumulators (conservative).
        return elems * (2 * itemsize + 8 * 4)

    divs = sorted(_divisors(nc), reverse=True)
    # First pass prefers a sublane-tile-aligned row count (8 | m*hf).
    for require_tile in (True, False):
        for d in divs:
            if require_tile and (d * hf) % 8 != 0:
                continue
            if d * hf * wf * itemsize <= block_cap and step_vmem(d) <= budget:
                return d, step_vmem(d)
    return 1, step_vmem(1)


def _make_tv_kernel(*, k, hf, w, wf, br, tp):
    """TV kernel over a (br, wf) lane-folded block (whole images only)."""

    def kernel(x_ref, htv_ref, wtv_ref, acc_h_ref, acc_w_ref):
        j = pl.program_id(1)  # reduction ("arbitrary") axis

        @pl.when(j == 0)
        def _init():
            acc_h_ref[...] = jnp.zeros_like(acc_h_ref)
            acc_w_ref[...] = jnp.zeros_like(acc_w_ref)

        x = x_ref[...].astype(jnp.float32)  # (br, wf)

        # ---- width term: x[r, c+1] - x[r, c] (lane-neighbour diff) --------
        xn = pltpu.roll(x, shift=wf - 1, axis=1) if wf > 1 else x
        dw = xn - x
        acc_w_ref[...] += dw * dw

        # ---- height term: next original row == +W shift in the flat image -
        if k == 1:
            # No folding needed (W >= 128): next row is the next sublane row.
            nxt = pltpu.roll(x, shift=br - 1, axis=0) if br > 1 else x
        else:
            a = pltpu.roll(x, shift=wf - w, axis=1)       # +W lanes, same row
            a2 = pltpu.roll(a, shift=br - 1, axis=0) if br > 1 else a
            lane = lax.broadcasted_iota(jnp.int32, (br, wf), 1)
            # Last fold segment wraps into the next folded row.
            nxt = jnp.where(lane < (wf - w), a, a2)
        dh = nxt - x
        acc_h_ref[...] += dh * dh

        @pl.when(j == tp - 1)
        def _finalize():
            row = lax.broadcasted_iota(jnp.int32, (br, wf), 0)
            col = lax.broadcasted_iota(jnp.int32, (br, wf), 1)
            # Width pairs are invalid at the last column of every original row.
            w_valid = (col % w) != (w - 1)
            # Height pairs are invalid for the last original row of each image
            # (last fold segment of the image's last folded row).
            h_valid = jnp.logical_not(
                ((row % hf) == (hf - 1)) & (col >= (k - 1) * w))
            h_tv = jnp.sum(jnp.where(h_valid, acc_h_ref[...], 0.0))
            w_tv = jnp.sum(jnp.where(w_valid, acc_w_ref[...], 0.0))
            htv_ref[...] = jnp.broadcast_to(h_tv, htv_ref.shape)
            wtv_ref[...] = jnp.broadcast_to(w_tv, wtv_ref.shape)

    return kernel


def tv_loss(x, tv_loss_weight=1.0):
    """x: (N, C, H, W) array. Returns scalar float32 TV loss (PyTorch TVLoss)."""
    n, c, h, w = x.shape
    nc = n * c
    itemsize = x.dtype.itemsize

    # ---- lane folding: smallest divisor k of H with k*W >= 128 lanes ------
    k = h
    for d in _divisors(h):
        if d * w >= _LANES:
            k = d
            break
    hf = h // k
    wf = k * w

    # ---- generation-aware VMEM budget (v7x: 64 MiB/TC, v5e/v6e: 128 MiB) --
    vmem_cap = 64 * 1024 * 1024
    try:
        info = pltpu.get_tpu_info()
        vmem_cap = int(getattr(info, "vmem_capacity_bytes", vmem_cap)) or vmem_cap
    except Exception:
        pass
    if vmem_cap >= 96 * 1024 * 1024:
        vmem_limit = 64 * 1024 * 1024
    else:
        vmem_limit = 40 * 1024 * 1024
    budget = vmem_limit - 6 * 1024 * 1024
    block_cap = 8 * 1024 * 1024  # diminishing returns past ~8 MiB input / step

    m, step_bytes = _choose_m(nc, hf, wf, itemsize, budget, block_cap)
    vmem_limit = max(vmem_limit, step_bytes + 8 * 1024 * 1024)

    br = m * hf                 # rows per grid step (whole images only)
    t = nc // m                 # number of reduction steps (tiles exactly)
    p_dim = 2 if (t >= 2 and t % 2 == 0) else 1   # megacore split when even
    tp = t // p_dim

    x3 = x.reshape(t, br, wf)   # free row-major reshape (no data movement)

    kernel = _make_tv_kernel(k=k, hf=hf, w=w, wf=wf, br=br, tp=tp)

    cost = pl.CostEstimate(
        flops=7 * nc * h * w,
        transcendentals=0,
        bytes_accessed=nc * h * w * itemsize + 2 * p_dim * _LANES * 4,
    )

    h_part, w_part = pl.pallas_call(
        kernel,
        out_shape=(
            jax.ShapeDtypeStruct((p_dim, 1, _LANES), jnp.float32),
            jax.ShapeDtypeStruct((p_dim, 1, _LANES), jnp.float32),
        ),
        grid_spec=pltpu.PrefetchScalarGridSpec(
            num_scalar_prefetch=0,
            grid=(p_dim, tp),
            in_specs=[
                pl.BlockSpec((None, br, wf), lambda p, j: (p * tp + j, 0, 0)),
            ],
            out_specs=(
                pl.BlockSpec((None, 1, _LANES), lambda p, j: (p, 0, 0)),
                pl.BlockSpec((None, 1, _LANES), lambda p, j: (p, 0, 0)),
            ),
            scratch_shapes=[
                pltpu.VMEM((br, wf), jnp.float32),
                pltpu.VMEM((br, wf), jnp.float32),
            ],
        ),
        compiler_params=pltpu.CompilerParams(
            dimension_semantics=("parallel", "arbitrary"),
            vmem_limit_bytes=int(vmem_limit),
        ),
        cost_estimate=cost,
    )(x3)

    count_h = c * (h - 1) * w
    count_w = c * h * (w - 1)
    h_tv = jnp.sum(h_part[:, 0, 0])
    w_tv = jnp.sum(w_part[:, 0, 0])
    return (tv_loss_weight * 1.0 * (h_tv / count_h + w_tv / count_w) / n).astype(
        jnp.float32)


def tv_loss_ref(x, tv_loss_weight=1.0):
    """Pure-JAX reference matching the PyTorch TVLoss forward."""
    n, c, h, w = x.shape
    count_h = c * (h - 1) * w
    count_w = c * h * (w - 1)
    h_tv = jnp.sum((x[:, :, 1:, :] - x[:, :, : h - 1, :]) ** 2)
    w_tv = jnp.sum((x[:, :, :, 1:] - x[:, :, :, : w - 1]) ** 2)
    return tv_loss_weight * 1.0 * (h_tv / count_h + w_tv / count_w) / n


if __name__ == "__main__":
    key = jax.random.PRNGKey(0)
    x = jax.random.normal(key, (2, 4, 16, 16), dtype=jnp.float32)

    out = jax.block_until_ready(tv_loss(x, tv_loss_weight=1.0))
    ref = jax.block_until_ready(tv_loss_ref(x, tv_loss_weight=1.0))

    assert jnp.allclose(out, ref, rtol=1e-5, atol=1e-5), (out, ref)
    print("KERNEL_OK")
</pallas_src>

<mosaic_0001>
module attributes {stable_mosaic.version = 11 : i64} {
  func.func @kernel(%arg0: i32, %arg1: i32, %arg2: memref<1x16x128xf32, #tpu.memory_space<vmem>>, %arg3: memref<1x1x128xf32, #tpu.memory_space<vmem>>, %arg4: memref<1x1x128xf32, #tpu.memory_space<vmem>>, %arg5: memref<16x128xf32, #tpu.memory_space<vmem>>, %arg6: memref<16x128xf32, #tpu.memory_space<vmem>>) attributes {dimension_semantics = [#tpu.dimension_semantics<parallel>, #tpu.dimension_semantics<arbitrary>], iteration_bounds = array<i64: 1, 1>, scalar_prefetch = 0 : i64, scratch_operands = 2 : i64, tpu.core_type = #tpu.core_type<tc>, window_params = [{transform_indices = @transform_0, window_bounds = array<i64: 1, 16, 128>}, {transform_indices = @transform_1, window_bounds = array<i64: 1, 1, 128>}, {transform_indices = @transform_2, window_bounds = array<i64: 1, 1, 128>}]} {
    %c0_i32 = arith.constant 0 : i32
    %0 = arith.cmpi eq, %arg1, %c0_i32 : i32
    %1 = arith.extui %0 : i1 to i32
    %c0_i32_0 = arith.constant 0 : i32
    %2 = arith.cmpi ne, %1, %c0_i32_0 : i32
    scf.if %2 {
      %cst = arith.constant 0.000000e+00 : f32
      %25 = vector.broadcast %cst : f32 to vector<16x128xf32>
      %c0_14 = arith.constant 0 : index
      %c0_15 = arith.constant 0 : index
      %26 = vector.load %arg5[%c0_14, %c0_15] : memref<16x128xf32, #tpu.memory_space<vmem>>, vector<16x128xf32>
      tpu.vector_store %arg5[%c0_14, %c0_15], %25 {strides = array<i32>} : memref<16x128xf32, #tpu.memory_space<vmem>>, vector<16x128xf32>,
      %cst_16 = arith.constant 0.000000e+00 : f32
      %27 = vector.broadcast %cst_16 : f32 to vector<16x128xf32>
      %c0_17 = arith.constant 0 : index
      %c0_18 = arith.constant 0 : index
      %28 = vector.load %arg6[%c0_17, %c0_18] : memref<16x128xf32, #tpu.memory_space<vmem>>, vector<16x128xf32>
      tpu.vector_store %arg6[%c0_17, %c0_18], %27 {strides = array<i32>} : memref<16x128xf32, #tpu.memory_space<vmem>>, vector<16x128xf32>,
    } else {
    }
    %c0 = arith.constant 0 : index
    %c0_1 = arith.constant 0 : index
    %c0_2 = arith.constant 0 : index
    %3 = vector.load %arg2[%c0, %c0_1, %c0_2] : memref<1x16x128xf32, #tpu.memory_space<vmem>>, vector<1x16x128xf32>
    %4 = vector.shape_cast %3 : vector<1x16x128xf32> to vector<16x128xf32>
    %c127_i32 = arith.constant 127 : i32
    %5 = tpu.dynamic_rotate %4 by %c127_i32 dim 1 : vector<16x128xf32>, i32 -> vector<16x128xf32>
    %6 = arith.subf %5, %4 : vector<16x128xf32>
    %c0_3 = arith.constant 0 : index
    %c0_4 = arith.constant 0 : index
    %7 = vector.load %arg6[%c0_3, %c0_4] : memref<16x128xf32, #tpu.memory_space<vmem>>, vector<16x128xf32>
    %8 = arith.mulf %6, %6 : vector<16x128xf32>
    %9 = arith.addf %7, %8 : vector<16x128xf32>
    %c0_5 = arith.constant 0 : index
    %c0_6 = arith.constant 0 : index
    %10 = vector.load %arg6[%c0_5, %c0_6] : memref<16x128xf32, #tpu.memory_space<vmem>>, vector<16x128xf32>
    tpu.vector_store %arg6[%c0_5, %c0_6], %9 {strides = array<i32>} : memref<16x128xf32, #tpu.memory_space<vmem>>, vector<16x128xf32>,
    %c112_i32 = arith.constant 112 : i32
    %11 = tpu.dynamic_rotate %4 by %c112_i32 dim 1 : vector<16x128xf32>, i32 -> vector<16x128xf32>
    %c15_i32 = arith.constant 15 : i32
    %12 = tpu.dynamic_rotate %11 by %c15_i32 dim 0 : vector<16x128xf32>, i32 -> vector<16x128xf32>
    %13 = tpu.iota {dimensions = array<i32: 1>} : vector<16x128xi32>
    %c112_i32_7 = arith.constant 112 : i32
    %14 = vector.broadcast %c112_i32_7 : i32 to vector<16x128xi32>
    %15 = arith.cmpi slt, %13, %14 : vector<16x128xi32>
    %16 = arith.select %15, %11, %12 : vector<16x128xi1>, vector<16x128xf32>
    %17 = arith.subf %16, %4 : vector<16x128xf32>
    %c0_8 = arith.constant 0 : index
    %c0_9 = arith.constant 0 : index
    %18 = vector.load %arg5[%c0_8, %c0_9] : memref<16x128xf32, #tpu.memory_space<vmem>>, vector<16x128xf32>
    %19 = arith.mulf %17, %17 : vector<16x128xf32>
    %20 = arith.addf %18, %19 : vector<16x128xf32>
    %c0_10 = arith.constant 0 : index
    %c0_11 = arith.constant 0 : index
    %21 = vector.load %arg5[%c0_10, %c0_11] : memref<16x128xf32, #tpu.memory_space<vmem>>, vector<16x128xf32>
    tpu.vector_store %arg5[%c0_10, %c0_11], %20 {strides = array<i32>} : memref<16x128xf32, #tpu.memory_space<vmem>>, vector<16x128xf32>,
    %c0_i32_12 = arith.constant 0 : i32
    %22 = arith.cmpi eq, %arg1, %c0_i32_12 : i32
    %23 = arith.extui %22 : i1 to i32
    %c0_i32_13 = arith.constant 0 : i32
    %24 = arith.cmpi ne, %23, %c0_i32_13 : i32
    scf.if %24 {
      %25 = tpu.iota {dimensions = array<i32: 0>} : vector<16x128xi32>
      %26 = tpu.iota {dimensions = array<i32: 1>} : vector<16x128xi32>
      %c16_i32 = arith.constant 16 : i32
      %c0_i32_14 = arith.constant 0 : i32
      %27 = arith.cmpi eq, %c16_i32, %c0_i32_14 : i32
      %c1_i32 = arith.constant 1 : i32
      %28 = arith.select %27, %c1_i32, %c16_i32 : i32
      %29 = vector.broadcast %28 : i32 to vector<16x128xi32>
      %30 = arith.remsi %26, %29 : vector<16x128xi32>
      %c0_i32_15 = arith.constant 0 : i32
      %31 = vector.broadcast %c0_i32_15 : i32 to vector<16x128xi32>
      %32 = arith.cmpi ne, %30, %31 : vector<16x128xi32>
      %c0_i32_16 = arith.constant 0 : i32
      %33 = vector.broadcast %c0_i32_16 : i32 to vector<16x128xi32>
      %34 = arith.cmpi slt, %30, %33 : vector<16x128xi32>
      %c0_i32_17 = arith.constant 0 : i32
      %35 = arith.cmpi slt, %28, %c0_i32_17 : i32
      %36 = vector.broadcast %35 : i1 to vector<16x128xi1>
      %37 = vector.broadcast %36 : vector<16x128xi1> to vector<16x128xi1>
      %38 = arith.xori %34, %37 : vector<16x128xi1>
      %39 = arith.andi %38, %32 : vector<16x128xi1>
      %40 = vector.broadcast %28 : i32 to vector<16x128xi32>
      %41 = arith.addi %30, %40 : vector<16x128xi32>
      %42 = arith.select %39, %41, %30 : vector<16x128xi1>, vector<16x128xi32>
      %c15_i32_18 = arith.constant 15 : i32
      %43 = vector.broadcast %c15_i32_18 : i32 to vector<16x128xi32>
      %44 = arith.cmpi ne, %42, %43 : vector<16x128xi32>
      %c2_i32 = arith.constant 2 : i32
      %c0_i32_19 = arith.constant 0 : i32
      %45 = arith.cmpi eq, %c2_i32, %c0_i32_19 : i32
      %c1_i32_20 = arith.constant 1 : i32
      %46 = arith.select %45, %c1_i32_20, %c2_i32 : i32
      %47 = vector.broadcast %46 : i32 to vector<16x128xi32>
      %48 = arith.remsi %25, %47 : vector<16x128xi32>
      %c0_i32_21 = arith.constant 0 : i32
      %49 = vector.broadcast %c0_i32_21 : i32 to vector<16x128xi32>
      %50 = arith.cmpi ne, %48, %49 : vector<16x128xi32>
      %c0_i32_22 = arith.constant 0 : i32
      %51 = vector.broadcast %c0_i32_22 : i32 to vector<16x128xi32>
      %52 = arith.cmpi slt, %48, %51 : vector<16x128xi32>
      %c0_i32_23 = arith.constant 0 : i32
      %53 = arith.cmpi slt, %46, %c0_i32_23 : i32
      %54 = vector.broadcast %53 : i1 to vector<16x128xi1>
      %55 = vector.broadcast %54 : vector<16x128xi1> to vector<16x128xi1>
      %56 = arith.xori %52, %55 : vector<16x128xi1>
      %57 = arith.andi %56, %50 : vector<16x128xi1>
      %58 = vector.broadcast %46 : i32 to vector<16x128xi32>
      %59 = arith.addi %48, %58 : vector<16x128xi32>
      %60 = arith.select %57, %59, %48 : vector<16x128xi1>, vector<16x128xi32>
      %c1_i32_24 = arith.constant 1 : i32
      %61 = vector.broadcast %c1_i32_24 : i32 to vector<16x128xi32>
      %62 = arith.cmpi eq, %60, %61 : vector<16x128xi32>
      %c112_i32_25 = arith.constant 112 : i32
      %63 = vector.broadcast %c112_i32_25 : i32 to vector<16x128xi32>
      %64 = arith.cmpi sge, %26, %63 : vector<16x128xi32>
      %65 = arith.andi %62, %64 : vector<16x128xi1>
      %cst = arith.constant dense<true> : vector<16x128xi1>
      %66 = arith.xori %65, %cst : vector<16x128xi1>
      %c0_26 = arith.constant 0 : index
      %c0_27 = arith.constant 0 : index
      %67 = vector.load %arg5[%c0_26, %c0_27] : memref<16x128xf32, #tpu.memory_space<vmem>>, vector<16x128xf32>
      %cst_28 = arith.constant 0.000000e+00 : f32
      %68 = vector.broadcast %cst_28 : f32 to vector<16x128xf32>
      %69 = arith.select %66, %67, %68 : vector<16x128xi1>, vector<16x128xf32>
      %70 = vector.shape_cast %69 : vector<16x128xf32> to vector<1x16x128xf32>
      %cst_29 = arith.constant dense<0.000000e+00> : vector<1xf32>
      %71 = vector.multi_reduction <add>, %70, %cst_29 [1, 2] : vector<1x16x128xf32> to vector<1xf32>
      %72 = vector.shape_cast %71 : vector<1xf32> to vector<1x1x1xf32>
      %73 = vector.extract %72[0, 0, 0] : f32 from vector<1x1x1xf32>
      %c0_30 = arith.constant 0 : index
      %c0_31 = arith.constant 0 : index
      %74 = vector.load %arg6[%c0_30, %c0_31] : memref<16x128xf32, #tpu.memory_space<vmem>>, vector<16x128xf32>
      %cst_32 = arith.constant 0.000000e+00 : f32
      %75 = vector.broadcast %cst_32 : f32 to vector<16x128xf32>
      %76 = arith.select %44, %74, %75 : vector<16x128xi1>, vector<16x128xf32>
      %77 = vector.shape_cast %76 : vector<16x128xf32> to vector<1x16x128xf32>
      %cst_33 = arith.constant dense<0.000000e+00> : vector<1xf32>
      %78 = vector.multi_reduction <add>, %77, %cst_33 [1, 2] : vector<1x16x128xf32> to vector<1xf32>
      %79 = vector.shape_cast %78 : vector<1xf32> to vector<1x1x1xf32>
      %80 = vector.extract %79[0, 0, 0] : f32 from vector<1x1x1xf32>
      %81 = vector.broadcast %73 : f32 to vector<1x128xf32>
      %c0_34 = arith.constant 0 : index
      %c0_35 = arith.constant 0 : index
      %c0_36 = arith.constant 0 : index
      %82 = vector.load %arg3[%c0_34, %c0_35, %c0_36] : memref<1x1x128xf32, #tpu.memory_space<vmem>>, vector<1x1x128xf32>
      %83 = vector.shape_cast %82 : vector<1x1x128xf32> to vector<1x128xf32>
      %84 = vector.shape_cast %81 : vector<1x128xf32> to vector<1x1x128xf32>
      tpu.vector_store %arg3[%c0_34, %c0_35, %c0_36], %84 {strides = array<i32>} : memref<1x1x128xf32, #tpu.memory_space<vmem>>, vector<1x1x128xf32>,
      %85 = vector.broadcast %80 : f32 to vector<1x128xf32>
      %c0_37 = arith.constant 0 : index
      %c0_38 = arith.constant 0 : index
      %c0_39 = arith.constant 0 : index
      %86 = vector.load %arg4[%c0_37, %c0_38, %c0_39] : memref<1x1x128xf32, #tpu.memory_space<vmem>>, vector<1x1x128xf32>
      %87 = vector.shape_cast %86 : vector<1x1x128xf32> to vector<1x128xf32>
      %88 = vector.shape_cast %85 : vector<1x128xf32> to vector<1x1x128xf32>
      tpu.vector_store %arg4[%c0_37, %c0_38, %c0_39], %88 {strides = array<i32>} : memref<1x1x128xf32, #tpu.memory_space<vmem>>, vector<1x1x128xf32>,
    } else {
    }
    return
  }
  func.func @transform_0(%arg0: i32, %arg1: i32) -> (i32, i32, i32) {
    %c1_i32 = arith.constant 1 : i32
    %0 = arith.muli %arg0, %c1_i32 : i32
    %1 = arith.addi %0, %arg1 : i32
    %c0_i32 = arith.constant 0 : i32
    %c0_i32_0 = arith.constant 0 : i32
    %c0_i32_1 = arith.constant 0 : i32
    return %1, %c0_i32, %c0_i32_0 : i32, i32, i32
  }
  func.func @transform_1(%arg0: i32, %arg1: i32) -> (i32, i32, i32) {
    %c0_i32 = arith.constant 0 : i32
    %c0_i32_0 = arith.constant 0 : i32
    %c0_i32_1 = arith.constant 0 : i32
    return %arg0, %c0_i32, %c0_i32_0 : i32, i32, i32
  }
  func.func @transform_2(%arg0: i32, %arg1: i32) -> (i32, i32, i32) {
    %c0_i32 = arith.constant 0 : i32
    %c0_i32_0 = arith.constant 0 : i32
    %c0_i32_1 = arith.constant 0 : i32
    return %arg0, %c0_i32, %c0_i32_0 : i32, i32, i32
  }
}

</mosaic_0001>

<llo_original>
// kernel: tpu_custom_call.1
$region0: #{tpu_custom_call.1}
  #allocation0 [shape = 'u32[]', space=smem, size = 0x4, offset = 0x4, fixed_abs, tag = 'smem constant byte address 0x4 - core index']
  #allocation1 [shape = 'u32[72,128]{1,0:T(1,128)}', space=vmem, size = 0x9000, scoped, tag = 'internal scratch']
  #allocation2 [shape = 'f32[16,128]{1,0:T(8,128)}', space=vmem, size = 0x2000, scoped, tag = 'scratch operand']
  #allocation3 [shape = 'f32[16,128]{1,0:T(8,128)}', space=vmem, size = 0x2000, scoped, tag = 'scratch operand']
  %s0 = inlined_call_operand.hbm [shape: f32[1,16,128], index: 0, kind: input, shape index: {}]
  %s1 = inlined_call_operand.hbm [shape: f32[1,1,128], index: 1, kind: output, shape index: {0}]
  %s2 = inlined_call_operand.hbm [shape: f32[1,1,128], index: 2, kind: output, shape index: {1}]
  %3 = xla_tuple %s1, %s2
  %s4 = sld [smem:[#allocation0]]
  $region34: #{tpu_custom_call.1} parent=0
    _
  %s6 = ssub.s32 1, %s4
  %s7 = scalar_select 0, %s6, %s4
  $region1: #{tpu_custom_call.1} parent=0
    #allocation4 [shape = 'u8[8192]{0}', space=vmem, size = 0x2000, scoped, tag = 'input window, operand 0, single buffered']
    #allocation5 [shape = 's32[1]{0}', space=sflag, size = 0x4, scoped, tag = 'scoped memory for tpu_custom_call.1']
    #allocation6 [shape = 's32[1]{0}', space=sflag, size = 0x4, scoped, tag = 'scoped memory for tpu_custom_call.1']
    #allocation7 [shape = 'u8[512]{0}', space=vmem, size = 0x400, scoped, tag = 'output window, operand 0, single buffered']
    #allocation8 [shape = 'u8[512]{0}', space=vmem, size = 0x400, scoped, tag = 'output window, operand 1, single buffered']
    #allocation9 [shape = 's32[1]{0}', space=sflag, size = 0x4, scoped, tag = 'scoped memory for tpu_custom_call.1']
    %8 = vsyncpa [#allocation5], 0
    %9 = vsyncpa [#allocation6], 0
    %10 = vsyncpa [#allocation9], 0
    // Predicated region
    $region2: #{tpu_custom_call.1} parent=1 // pred_check
      _
    $region3: #{tpu_custom_call.1} parent=1 // pred_check_branch
      %12 = sbr.rel (0) target = $region5
    $region4: #{tpu_custom_call.1} parent=1 // pred_region
      %s13 = sadd.s32 0, 0
      %15 = vsyncadd [#allocation5], 0
      %s16 = smul.addr %s13, 2
      %s17 = smul.addr %s16, 8
      %s18 = scalar_lea.hbm %s0, %s17
      %s19 = sshll.u32 %s18, 4
      %s20 = int_to_ptr.hbm [resolvable:$true] %s19
      %s21 = sshll.u32 [#allocation4], 4
      %s22 = int_to_ptr.vmem [resolvable:$true] %s21
      %27 = dma.hbm_to_vmem [thread:$0]  %s20, 256, %s22, [#allocation5], 128, 128, 8
    $region5: #{tpu_custom_call.1} parent=1 // pred_fallthru
      _
    // Predicated region
    $region6: #{tpu_custom_call.1} parent=1 // pred_check
      _
    $region7: #{tpu_custom_call.1} parent=1 // pred_check_branch
      %29 = sbr.rel (0) target = $region9
    $region8: #{tpu_custom_call.1} parent=1 // pred_region
      %31 = dma.done [#allocation5], 256
    $region9: #{tpu_custom_call.1} parent=1 // pred_fallthru
      _
    %s32 = sadd.s32 0, 0
    %p33 = scmp.eq.s32.totalorder 0, 0
    // Predicated region
    $region10: #{tpu_custom_call.1} parent=1 // pred_check
      %p34 = pneg %p33
    $region11: #{tpu_custom_call.1} parent=1 // pred_check_branch
      %36 = sbr.rel (%p34) target = $region13
    $region12: #{tpu_custom_call.1} parent=1 // pred_region
      %37 = vst [vmem:[#allocation2] sm:$0xff] 0.0
      %38 = vst [vmem:[#allocation2 + $0x8] sm:$0xff] 0.0
      %39 = vst [vmem:[#allocation3] sm:$0xff] 0.0
      %40 = vst [vmem:[#allocation3 + $0x8] sm:$0xff] 0.0
    $region13: #{tpu_custom_call.1} parent=1 // pred_fallthru
      _
    %v41 = vld [vmem:[#allocation4] sm:$0xff]
    %v42 = vld [vmem:[#allocation4 + $0x8] sm:$0xff]
    %43 = vrot.lane.b32.xlu0 %v41, 127
    %v44 = vpop.permute.xlu0 %43
    %45 = vrot.lane.b32.xlu0 %v42, 127
    %v46 = vpop.permute.xlu0 %45
    %v47 = vsub.f32 %v44, %v41
    %v48 = vsub.f32 %v46, %v42
    %v49 = vld [vmem:[#allocation3] sm:$0xff]
    %v50 = vld [vmem:[#allocation3 + $0x8] sm:$0xff]
    %v51 = vmul.f32 %v47, %v47
    %v52 = vmul.f32 %v48, %v48
    %v53 = vadd.f32 %v49, %v51
    %v54 = vadd.f32 %v50, %v52
    %55 = vst [vmem:[#allocation3] sm:$0xff] %v53
    %56 = vst [vmem:[#allocation3 + $0x8] sm:$0xff] %v54
    %57 = vrot.lane.b32.xlu0 %v41, 112
    %v58 = vpop.permute.xlu0 %57
    %59 = vrot.lane.b32.xlu0 %v42, 112
    %v60 = vpop.permute.xlu0 %59
    %v61 = vrot.slane %v58, 1
    %v62 = vrot.slane %v60, 1
    %v63 = vlaneseq
    %v64 = vshrl.u32 %v63, 7
    %vm65 = vcmp.lt.s32.totalorder %v64, 7
    %v66 = vsel %vm65, %v61, %v62
    %v67 = vsel %vm65, %v62, %v61
    %v68 = vlaneseq
    %v69 = vand.u32 %v68, 127
    %vm70 = vcmp.lt.s32.totalorder %v69, 112
    %v71 = vsel %vm70, %v58, %v66
    %v72 = vsel %vm70, %v60, %v67
    %v73 = vsub.f32 %v71, %v41
    %v74 = vsub.f32 %v72, %v42
    %v75 = vld [vmem:[#allocation2] sm:$0xff]
    %v76 = vld [vmem:[#allocation2 + $0x8] sm:$0xff]
    %v77 = vmul.f32 %v73, %v73
    %v78 = vmul.f32 %v74, %v74
    %v79 = vadd.f32 %v75, %v77
    %v80 = vadd.f32 %v76, %v78
    %81 = vst [vmem:[#allocation2] sm:$0xff] %v79
    %82 = vst [vmem:[#allocation2 + $0x8] sm:$0xff] %v80
    // Predicated region
    $region14: #{tpu_custom_call.1} parent=1 // pred_check
      %p83 = pneg %p33
    $region15: #{tpu_custom_call.1} parent=1 // pred_check_branch
      %85 = sbr.rel (%p83) target = $region17
    $region16: #{tpu_custom_call.1} parent=1 // pred_region
      %v86 = vadd.s32 %v64, 8
      %vm87 = vcmp.lt.s32.totalorder %v69, 0
      %v88 = vsub.s32 0, %v69
      %v89 = vsel %vm87, %v88, %v69
      %v90 = vshrl.u32 %v89, 4
      %v91 = vand.u32 %v89, 15
      %v92 = vsub.s32 0, %v91
      %v93 = vsel %vm87, %v92, %v91
      %vm94 = vcmp.ne.s32.totalorder %v93, 0
      %vm95 = vcmp.lt.s32.totalorder %v93, 0
      %vm96 = vmand %vm95, %vm94
      %v97 = vadd.s32 %v93, 16
      %v98 = vsel %vm96, %v97, %v93
      %vm99 = vcmp.ne.s32.totalorder %v98, 15
      %vm100 = vcmp.lt.s32.totalorder %v64, 0
      %v101 = vsub.s32 0, %v64
      %v102 = vsel %vm100, %v101, %v64
      %v103 = vshrl.u32 %v102, 1
      %v104 = vand.u32 %v102, 1
      %v105 = vsub.s32 0, %v104
      %v106 = vsel %vm100, %v105, %v104
      %vm107 = vcmp.lt.s32.totalorder %v86, 0
      %v108 = vsub.s32 0, %v86
      %v109 = vsel %vm107, %v108, %v86
      %v110 = vshrl.u32 %v109, 1
      %v111 = vand.u32 %v109, 1
      %v112 = vsub.s32 0, %v111
      %v113 = vsel %vm107, %v112, %v111
      %vm114 = vcmp.ne.s32.totalorder %v106, 0
      %vm115 = vcmp.ne.s32.totalorder %v113, 0
      %vm116 = vcmp.lt.s32.totalorder %v106, 0
      %vm117 = vcmp.lt.s32.totalorder %v113, 0
      %vm118 = vmand %vm116, %vm114
      %vm119 = vmand %vm117, %vm115
      %v120 = vadd.s32 %v106, 2
      %v121 = vadd.s32 %v113, 2
      %v122 = vsel %vm118, %v120, %v106
      %v123 = vsel %vm119, %v121, %v113
      %vm124 = vcmp.eq.s32.totalorder %v122, 1
      %vm125 = vcmp.eq.s32.totalorder %v123, 1
      %vm126 = vcmp.ge.s32.totalorder %v69, 112
      %vm127 = vmand %vm124, %vm126
      %vm128 = vmand %vm125, %vm126
      %vm129 = vmxor %vm127, 1
      %vm130 = vmxor %vm128, 1
      %v131 = vld [vmem:[#allocation2] sm:$0xff]
      %v132 = vld [vmem:[#allocation2 + $0x8] sm:$0xff]
      %v133 = vsel %vm129, %v131, 0.0
      %v134 = vsel %vm130, %v132, 0.0
      %v135 = vadd.f32 %v133, %v134
      %136 = vadd.xlane.f32.xlu0 %v135
      %v137 = vpop.xlane.xlu0 %136
      %v138 = vrot.slane %v137, 4
      %v139 = vadd.f32 %v137, %v138
      %v140 = vrot.slane %v139, 2
      %v141 = vadd.f32 %v139, %v140
      %v142 = vrot.slane %v141, 1
      %v143 = vadd.f32 %v141, %v142
      %s144 = vtos %v143
      %v145 = vld [vmem:[#allocation3] sm:$0xff]
      %v146 = vld [vmem:[#allocation3 + $0x8] sm:$0xff]
      %v147 = vsel %vm99, %v145, 0.0
      %v148 = vsel %vm99, %v146, 0.0
      %v149 = vadd.f32 %v147, %v148
      %150 = vadd.xlane.f32.xlu0 %v149
      %v151 = vpop.xlane.xlu0 %150
      %v152 = vrot.slane %v151, 4
      %v153 = vadd.f32 %v151, %v152
      %v154 = vrot.slane %v153, 2
      %v155 = vadd.f32 %v153, %v154
      %v156 = vrot.slane %v155, 1
      %v157 = vadd.f32 %v155, %v156
      %s158 = vtos %v157
      %v159 = vstv %s144
      %160 = vst [vmem:[#allocation7] sm:$0x1] %v159
      %v161 = vstv %s158
      %162 = vst [vmem:[#allocation8] sm:$0x1] %v161
    $region17: #{tpu_custom_call.1} parent=1 // pred_fallthru
      _
    // Predicated region
    $region18: #{tpu_custom_call.1} parent=1 // pred_check
      _
    $region19: #{tpu_custom_call.1} parent=1 // pred_check_branch
      %164 = sbr.rel (0) target = $region21
    $region20: #{tpu_custom_call.1} parent=1 // pred_region
      %166 = vsyncadd [#allocation6], 0
      %s168 = sshll.u32 [#allocation7], 4
      %s169 = int_to_ptr.vmem [resolvable:$true] %s168
      %s170 = sshll.u32 %s1, 4
      %s171 = int_to_ptr.hbm [resolvable:$true] %s170
      %173 = dma.vmem_to_hbm [thread:$0]  %s169, 16, %s171, [#allocation6]
    $region21: #{tpu_custom_call.1} parent=1 // pred_fallthru
      _
    // Predicated region
    $region22: #{tpu_custom_call.1} parent=1 // pred_check
      _
    $region23: #{tpu_custom_call.1} parent=1 // pred_check_branch
      %175 = sbr.rel (0) target = $region25
    $region24: #{tpu_custom_call.1} parent=1 // pred_region
      %177 = vsyncadd [#allocation9], 0
      %s179 = sshll.u32 [#allocation8], 4
      %s180 = int_to_ptr.vmem [resolvable:$true] %s179
      %s181 = sshll.u32 %s2, 4
      %s182 = int_to_ptr.hbm [resolvable:$true] %s181
      %184 = dma.vmem_to_hbm [thread:$0]  %s180, 16, %s182, [#allocation9]
    $region25: #{tpu_custom_call.1} parent=1 // pred_fallthru
      _
    // Predicated region
    $region26: #{tpu_custom_call.1} parent=1 // pred_check
      _
    $region27: #{tpu_custom_call.1} parent=1 // pred_check_branch
      %186 = sbr.rel (0) target = $region29
    $region28: #{tpu_custom_call.1} parent=1 // pred_region
      %188 = dma.done [#allocation6], 16
    $region29: #{tpu_custom_call.1} parent=1 // pred_fallthru
      _
    // Predicated region
    $region30: #{tpu_custom_call.1} parent=1 // pred_check
      _
    $region31: #{tpu_custom_call.1} parent=1 // pred_check_branch
      %190 = sbr.rel (0) target = $region33
    $region32: #{tpu_custom_call.1} parent=1 // pred_region
      %192 = dma.done [#allocation9], 16
    $region33: #{tpu_custom_call.1} parent=1 // pred_fallthru
      _
    %193 = vsyncpa [#allocation5], 1
    %194 = vsyncpa [#allocation6], 1
    %195 = vsyncpa [#allocation9], 1

</llo_original>
